<compile_context>
chip_gen: v6e
topology: v6e:2x2x1
jax: 0.10.0
libtpu: 0.0.40
codegen_flags: <defaults>
</compile_context>

<pallas_src>
import jax
import jax.numpy as jnp
from jax import lax
from jax.experimental import pallas as pl
from jax.experimental.pallas import tpu as pltpu

EPSILON = 1e-8
HIGHEST = lax.Precision.HIGHEST  # only used by the pure-JAX reference


def painn_mixing_kernel(q_ref, mu_ref, wmix_ref, w1_ref, b1_ref, w2_ref, b2_ref,
                        q_out_ref, mu_out_ref):
    F = q_ref.shape[-1]

    q = q_ref[...]                                   # [TN, F]
    mu = mu_ref[...]                                 # [TN, 3F]
    wmix = wmix_ref[...]                             # [F, 2F]

    # mu_channel_mix: Dense(F -> 2F, bias=False) applied to each Cartesian component.
    # Static unroll over the three lane slabs (for F a multiple of 128 the slices are
    # tile-aligned and free; for small F they are a cheap in-vreg lane select).
    mu_V = []
    mu_W = []
    for c in range(3):
        mu_c = mu[:, c * F:(c + 1) * F]              # [TN, F]
        mix_c = jnp.dot(mu_c, wmix, preferred_element_type=jnp.float32)   # [TN, 2F]
        mu_V.append(mix_c[:, :F])
        mu_W.append(mix_c[:, F:])

    # Cartesian reductions are element-wise across the three lane slabs (no cross-lane reduce).
    mu_Vn = jnp.sqrt(mu_V[0] * mu_V[0] + mu_V[1] * mu_V[1] + mu_V[2] * mu_V[2] + EPSILON)
    vw = mu_V[0] * mu_W[0] + mu_V[1] * mu_W[1] + mu_V[2] * mu_W[2]        # [TN, F]

    # intra_atomic_net: Dense(2F -> F, SiLU) then Dense(F -> 3F, linear).
    # concat([q, mu_Vn]) @ W1 is split into two matmuls against the two halves of W1
    # (same FLOPs, avoids materialising an in-kernel lane concatenate on the contraction operand).
    w1 = w1_ref[...]                                 # [2F, F]
    h = (jnp.dot(q, w1[:F, :], preferred_element_type=jnp.float32)
         + jnp.dot(mu_Vn, w1[F:, :], preferred_element_type=jnp.float32)
         + b1_ref[...])
    h = h * jax.nn.sigmoid(h)                        # SiLU (EUP sigmoid + VPU mul)
    x = jnp.dot(h, w2_ref[...], preferred_element_type=jnp.float32) + b2_ref[...]  # [TN, 3F]

    dq_intra = x[:, 0 * F:1 * F]
    dmu_intra = x[:, 1 * F:2 * F]
    dqmu_intra = x[:, 2 * F:3 * F]

    q_out_ref[...] = q + dq_intra + dqmu_intra * vw
    # Single lane-dense [TN, 3F] store for the vector channel.
    mu_out_ref[...] = mu + jnp.concatenate(
        [dmu_intra * mu_W[0], dmu_intra * mu_W[1], dmu_intra * mu_W[2]], axis=-1)


def _pick_tile_n(n):
    """Largest atom tile (multiple of 8) that does not exceed the problem size (cap 512)."""
    for t in (512, 256, 128, 64, 32, 16, 8):
        if n >= t:
            return t
    return 8


def painn_mixing(q, mu, w_mix, w1, b1, w2, b2, *, tile_n=None):
    N, F = q.shape
    assert mu.shape == (N, 3 * F)
    if tile_n is None:
        tile_n = _pick_tile_n(N)

    # Pad the atom axis to a multiple of the tile; padded rows are zeros (safe: sqrt(0+eps)).
    n_pad = pl.cdiv(N, tile_n) * tile_n
    if n_pad != N:
        q = jnp.pad(q, ((0, n_pad - N), (0, 0)))
        mu = jnp.pad(mu, ((0, n_pad - N), (0, 0)))

    grid = (n_pad // tile_n,)

    def tiled(shape):
        return pl.BlockSpec(shape, lambda i: (i, 0))

    def resident(shape):                              # same block every step -> stays in VMEM
        return pl.BlockSpec(shape, lambda i: (0, 0))

    flops = 22 * n_pad * F * F + 30 * n_pad * F       # 3 mixing + 3 MLP matmuls + elementwise
    bytes_accessed = 4 * (8 * n_pad * F + 7 * F * F + 4 * F)
    cost = pl.CostEstimate(flops=flops, transcendentals=2 * n_pad * F,
                           bytes_accessed=bytes_accessed)

    q_out, mu_out = pl.pallas_call(
        painn_mixing_kernel,
        grid=grid,
        in_specs=[tiled((tile_n, F)), tiled((tile_n, 3 * F)),
                  resident((F, 2 * F)), resident((2 * F, F)), resident((1, F)),
                  resident((F, 3 * F)), resident((1, 3 * F))],
        out_specs=[tiled((tile_n, F)), tiled((tile_n, 3 * F))],
        out_shape=[jax.ShapeDtypeStruct((n_pad, F), jnp.float32),
                   jax.ShapeDtypeStruct((n_pad, 3 * F), jnp.float32)],
        compiler_params=pltpu.CompilerParams(
            dimension_semantics=("parallel",),        # independent atom tiles -> megacore on v7x
            vmem_limit_bytes=64 * 1024 * 1024),
        cost_estimate=cost,
    )(q, mu, w_mix, w1, b1, w2, b2)

    if n_pad != N:
        q_out = q_out[:N]
        mu_out = mu_out[:N]
    return q_out, mu_out


def reference(q, mu, w_mix, w1, b1, w2, b2, eps=EPSILON):
    """Pure-JAX mirror of PaiNNMixing.forward (q: [N,1,F], mu: [N,3,F]) at f32 HIGHEST precision."""
    F = q.shape[-1]
    mu_mix = jnp.matmul(mu, w_mix, precision=HIGHEST)                    # [N, 3, 2F]
    mu_V, mu_W = mu_mix[..., :F], mu_mix[..., F:]
    mu_Vn = jnp.sqrt(jnp.sum(mu_V ** 2, axis=-2, keepdims=True) + eps)   # [N, 1, F]
    ctx = jnp.concatenate([q, mu_Vn], axis=-1)                           # [N, 1, 2F]
    h = jnp.matmul(ctx, w1, precision=HIGHEST) + b1
    h = jax.nn.silu(h)
    x = jnp.matmul(h, w2, precision=HIGHEST) + b2                        # [N, 1, 3F]
    dq_intra, dmu_intra, dqmu_intra = x[..., :F], x[..., F:2 * F], x[..., 2 * F:]
    dmu = dmu_intra * mu_W                                               # [N, 3, F]
    dqmu = dqmu_intra * jnp.sum(mu_V * mu_W, axis=1, keepdims=True)      # [N, 1, F]
    return q + dq_intra + dqmu, mu + dmu


if __name__ == "__main__":
    N, F = 16, 32                                     # atoms, nr_atom_basis

    key = jax.random.PRNGKey(0)
    k = jax.random.split(key, 7)
    q_in = jax.random.normal(k[0], (N, 1, F), jnp.float32)
    mu_in = jax.random.normal(k[1], (N, 3, F), jnp.float32)

    # Parameters (Dense applied as x @ W + b; mu_channel_mix has no bias)
    w_mix = 0.1 * jax.random.normal(k[2], (F, 2 * F), jnp.float32)
    w1 = 0.1 * jax.random.normal(k[3], (2 * F, F), jnp.float32)
    b1 = 0.1 * jax.random.normal(k[4], (1, F), jnp.float32)
    w2 = 0.1 * jax.random.normal(k[5], (F, 3 * F), jnp.float32)
    b2 = 0.1 * jax.random.normal(k[6], (1, 3 * F), jnp.float32)

    # Kernel layouts (see layout comment above); reshape [N,3,F] -> [N,3F] is free.
    q_k = q_in[:, 0, :]                               # [N, F]
    mu_k = mu_in.reshape(N, 3 * F)                    # [N, 3F] (Cartesian slabs on the lane axis)

    q_out, mu_out = painn_mixing(q_k, mu_k, w_mix, w1, b1, w2, b2)
    jax.block_until_ready((q_out, mu_out))

    ref_q, ref_mu = reference(q_in, mu_in, w_mix, w1, b1, w2, b2)
    # Kernel matmuls use default (bf16-pass, f32-accumulate) MXU precision; tolerance covers that
    # rounding vs. the HIGHEST-precision reference.
    assert jnp.allclose(q_out, ref_q[:, 0, :], atol=2e-2, rtol=2e-2)
    assert jnp.allclose(mu_out.reshape(N, 3, F), ref_mu, atol=2e-2, rtol=2e-2)

    print("KERNEL_OK")
</pallas_src>

<mosaic_0001>
module attributes {stable_mosaic.version = 11 : i64} {
  func.func @painn_mixing_kernel(%arg0: i32, %arg1: memref<16x32xf32, #tpu.memory_space<vmem>>, %arg2: memref<16x96xf32, #tpu.memory_space<vmem>>, %arg3: memref<32x64xf32, #tpu.memory_space<vmem>>, %arg4: memref<64x32xf32, #tpu.memory_space<vmem>>, %arg5: memref<1x32xf32, #tpu.memory_space<vmem>>, %arg6: memref<32x96xf32, #tpu.memory_space<vmem>>, %arg7: memref<1x96xf32, #tpu.memory_space<vmem>>, %arg8: memref<16x32xf32, #tpu.memory_space<vmem>>, %arg9: memref<16x96xf32, #tpu.memory_space<vmem>>) attributes {dimension_semantics = [#tpu.dimension_semantics<parallel>], iteration_bounds = array<i64: 1>, scalar_prefetch = 0 : i64, scratch_operands = 0 : i64, tpu.core_type = #tpu.core_type<tc>, window_params = [{transform_indices = @transform_0, window_bounds = array<i64: 16, 32>}, {transform_indices = @transform_1, window_bounds = array<i64: 16, 96>}, {pipeline_mode = #tpu.pipeline_mode<synchronous>, transform_indices = @transform_2, window_bounds = array<i64: 32, 64>}, {pipeline_mode = #tpu.pipeline_mode<synchronous>, transform_indices = @transform_3, window_bounds = array<i64: 64, 32>}, {pipeline_mode = #tpu.pipeline_mode<synchronous>, transform_indices = @transform_4, window_bounds = array<i64: 1, 32>}, {pipeline_mode = #tpu.pipeline_mode<synchronous>, transform_indices = @transform_5, window_bounds = array<i64: 32, 96>}, {pipeline_mode = #tpu.pipeline_mode<synchronous>, transform_indices = @transform_6, window_bounds = array<i64: 1, 96>}, {transform_indices = @transform_7, window_bounds = array<i64: 16, 32>}, {transform_indices = @transform_8, window_bounds = array<i64: 16, 96>}]} {
    %c0 = arith.constant 0 : index
    %c0_0 = arith.constant 0 : index
    %0 = vector.load %arg1[%c0, %c0_0] : memref<16x32xf32, #tpu.memory_space<vmem>>, vector<16x32xf32>
    %c0_1 = arith.constant 0 : index
    %c0_2 = arith.constant 0 : index
    %1 = vector.load %arg2[%c0_1, %c0_2] : memref<16x96xf32, #tpu.memory_space<vmem>>, vector<16x96xf32>
    %c0_3 = arith.constant 0 : index
    %c0_4 = arith.constant 0 : index
    %2 = vector.load %arg3[%c0_3, %c0_4] : memref<32x64xf32, #tpu.memory_space<vmem>>, vector<32x64xf32>
    %3 = vector.extract_strided_slice %1 {offsets = [0, 0], sizes = [16, 32], strides = [1, 1]} : vector<16x96xf32> to vector<16x32xf32>
    %cst = arith.constant dense<0.000000e+00> : vector<16x64xf32>
    %4 = tpu.matmul %3, %2, %cst {dimension_numbers = #tpu.dot_dimension_numbers<[1], [0], [0], [1], [0, 0, 1, 1], [], []>} : vector<16x32xf32>, vector<32x64xf32>, vector<16x64xf32> -> vector<16x64xf32>
    %5 = vector.extract_strided_slice %4 {offsets = [0, 0], sizes = [16, 32], strides = [1, 1]} : vector<16x64xf32> to vector<16x32xf32>
    %6 = vector.extract_strided_slice %4 {offsets = [0, 32], sizes = [16, 32], strides = [1, 1]} : vector<16x64xf32> to vector<16x32xf32>
    %7 = vector.extract_strided_slice %1 {offsets = [0, 32], sizes = [16, 32], strides = [1, 1]} : vector<16x96xf32> to vector<16x32xf32>
    %cst_5 = arith.constant dense<0.000000e+00> : vector<16x64xf32>
    %8 = tpu.matmul %7, %2, %cst_5 {dimension_numbers = #tpu.dot_dimension_numbers<[1], [0], [0], [1], [0, 0, 1, 1], [], []>} : vector<16x32xf32>, vector<32x64xf32>, vector<16x64xf32> -> vector<16x64xf32>
    %9 = vector.extract_strided_slice %8 {offsets = [0, 0], sizes = [16, 32], strides = [1, 1]} : vector<16x64xf32> to vector<16x32xf32>
    %10 = vector.extract_strided_slice %8 {offsets = [0, 32], sizes = [16, 32], strides = [1, 1]} : vector<16x64xf32> to vector<16x32xf32>
    %11 = vector.extract_strided_slice %1 {offsets = [0, 64], sizes = [16, 32], strides = [1, 1]} : vector<16x96xf32> to vector<16x32xf32>
    %cst_6 = arith.constant dense<0.000000e+00> : vector<16x64xf32>
    %12 = tpu.matmul %11, %2, %cst_6 {dimension_numbers = #tpu.dot_dimension_numbers<[1], [0], [0], [1], [0, 0, 1, 1], [], []>} : vector<16x32xf32>, vector<32x64xf32>, vector<16x64xf32> -> vector<16x64xf32>
    %13 = vector.extract_strided_slice %12 {offsets = [0, 0], sizes = [16, 32], strides = [1, 1]} : vector<16x64xf32> to vector<16x32xf32>
    %14 = vector.extract_strided_slice %12 {offsets = [0, 32], sizes = [16, 32], strides = [1, 1]} : vector<16x64xf32> to vector<16x32xf32>
    %15 = arith.mulf %5, %5 : vector<16x32xf32>
    %16 = arith.mulf %9, %9 : vector<16x32xf32>
    %17 = arith.addf %15, %16 : vector<16x32xf32>
    %18 = arith.mulf %13, %13 : vector<16x32xf32>
    %19 = arith.addf %17, %18 : vector<16x32xf32>
    %cst_7 = arith.constant 9.99999993E-9 : f32
    %20 = vector.broadcast %cst_7 : f32 to vector<16x32xf32>
    %21 = arith.addf %19, %20 : vector<16x32xf32>
    %22 = math.sqrt %21 : vector<16x32xf32>
    %23 = arith.mulf %5, %6 : vector<16x32xf32>
    %24 = arith.mulf %9, %10 : vector<16x32xf32>
    %25 = arith.addf %23, %24 : vector<16x32xf32>
    %26 = arith.mulf %13, %14 : vector<16x32xf32>
    %27 = arith.addf %25, %26 : vector<16x32xf32>
    %c0_8 = arith.constant 0 : index
    %c0_9 = arith.constant 0 : index
    %28 = vector.load %arg4[%c0_8, %c0_9] : memref<64x32xf32, #tpu.memory_space<vmem>>, vector<64x32xf32>
    %29 = vector.extract_strided_slice %28 {offsets = [0, 0], sizes = [32, 32], strides = [1, 1]} : vector<64x32xf32> to vector<32x32xf32>
    %cst_10 = arith.constant dense<0.000000e+00> : vector<16x32xf32>
    %30 = tpu.matmul %0, %29, %cst_10 {dimension_numbers = #tpu.dot_dimension_numbers<[1], [0], [0], [1], [0, 0, 1, 1], [], []>} : vector<16x32xf32>, vector<32x32xf32>, vector<16x32xf32> -> vector<16x32xf32>
    %31 = vector.extract_strided_slice %28 {offsets = [32, 0], sizes = [32, 32], strides = [1, 1]} : vector<64x32xf32> to vector<32x32xf32>
    %cst_11 = arith.constant dense<0.000000e+00> : vector<16x32xf32>
    %32 = tpu.matmul %22, %31, %cst_11 {dimension_numbers = #tpu.dot_dimension_numbers<[1], [0], [0], [1], [0, 0, 1, 1], [], []>} : vector<16x32xf32>, vector<32x32xf32>, vector<16x32xf32> -> vector<16x32xf32>
    %33 = arith.addf %30, %32 : vector<16x32xf32>
    %c0_12 = arith.constant 0 : index
    %c0_13 = arith.constant 0 : index
    %34 = vector.load %arg5[%c0_12, %c0_13] : memref<1x32xf32, #tpu.memory_space<vmem>>, vector<1x32xf32>
    %35 = vector.broadcast %34 : vector<1x32xf32> to vector<16x32xf32>
    %36 = arith.addf %33, %35 : vector<16x32xf32>
    %37 = arith.negf %36 : vector<16x32xf32>
    %38 = math.exp %37 : vector<16x32xf32>
    %cst_14 = arith.constant 1.000000e+00 : f32
    %39 = vector.broadcast %cst_14 : f32 to vector<16x32xf32>
    %40 = arith.addf %39, %38 : vector<16x32xf32>
    %41 = arith.divf %39, %40 : vector<16x32xf32>
    %42 = arith.mulf %36, %41 : vector<16x32xf32>
    %c0_15 = arith.constant 0 : index
    %c0_16 = arith.constant 0 : index
    %43 = vector.load %arg6[%c0_15, %c0_16] : memref<32x96xf32, #tpu.memory_space<vmem>>, vector<32x96xf32>
    %cst_17 = arith.constant dense<0.000000e+00> : vector<16x96xf32>
    %44 = tpu.matmul %42, %43, %cst_17 {dimension_numbers = #tpu.dot_dimension_numbers<[1], [0], [0], [1], [0, 0, 1, 1], [], []>} : vector<16x32xf32>, vector<32x96xf32>, vector<16x96xf32> -> vector<16x96xf32>
    %c0_18 = arith.constant 0 : index
    %c0_19 = arith.constant 0 : index
    %45 = vector.load %arg7[%c0_18, %c0_19] : memref<1x96xf32, #tpu.memory_space<vmem>>, vector<1x96xf32>
    %46 = vector.broadcast %45 : vector<1x96xf32> to vector<16x96xf32>
    %47 = arith.addf %44, %46 : vector<16x96xf32>
    %48 = vector.extract_strided_slice %47 {offsets = [0, 0], sizes = [16, 32], strides = [1, 1]} : vector<16x96xf32> to vector<16x32xf32>
    %49 = vector.extract_strided_slice %47 {offsets = [0, 32], sizes = [16, 32], strides = [1, 1]} : vector<16x96xf32> to vector<16x32xf32>
    %50 = vector.extract_strided_slice %47 {offsets = [0, 64], sizes = [16, 32], strides = [1, 1]} : vector<16x96xf32> to vector<16x32xf32>
    %51 = arith.addf %0, %48 : vector<16x32xf32>
    %52 = arith.mulf %50, %27 : vector<16x32xf32>
    %53 = arith.addf %51, %52 : vector<16x32xf32>
    %c0_20 = arith.constant 0 : index
    %c0_21 = arith.constant 0 : index
    %54 = vector.load %arg8[%c0_20, %c0_21] : memref<16x32xf32, #tpu.memory_space<vmem>>, vector<16x32xf32>
    tpu.vector_store %arg8[%c0_20, %c0_21], %53 {strides = array<i32>} : memref<16x32xf32, #tpu.memory_space<vmem>>, vector<16x32xf32>,
    %55 = arith.mulf %49, %6 : vector<16x32xf32>
    %56 = arith.mulf %49, %10 : vector<16x32xf32>
    %57 = arith.mulf %49, %14 : vector<16x32xf32>
    %58 = tpu.concatenate %55, %56, %57 in 1 : vector<16x32xf32>, vector<16x32xf32>, vector<16x32xf32> -> vector<16x96xf32>
    %59 = arith.addf %1, %58 : vector<16x96xf32>
    %c0_22 = arith.constant 0 : index
    %c0_23 = arith.constant 0 : index
    %60 = vector.load %arg9[%c0_22, %c0_23] : memref<16x96xf32, #tpu.memory_space<vmem>>, vector<16x96xf32>
    tpu.vector_store %arg9[%c0_22, %c0_23], %59 {strides = array<i32>} : memref<16x96xf32, #tpu.memory_space<vmem>>, vector<16x96xf32>,
    return
  }
  func.func @transform_0(%arg0: i32) -> (i32, i32) {
    %c0_i32 = arith.constant 0 : i32
    %c0_i32_0 = arith.constant 0 : i32
    return %arg0, %c0_i32 : i32, i32
  }
  func.func @transform_1(%arg0: i32) -> (i32, i32) {
    %c0_i32 = arith.constant 0 : i32
    %c0_i32_0 = arith.constant 0 : i32
    return %arg0, %c0_i32 : i32, i32
  }
  func.func @transform_2(%arg0: i32) -> (i32, i32) {
    %c0_i32 = arith.constant 0 : i32
    %c0_i32_0 = arith.constant 0 : i32
    %c0_i32_1 = arith.constant 0 : i32
    return %c0_i32, %c0_i32_0 : i32, i32
  }
  func.func @transform_3(%arg0: i32) -> (i32, i32) {
    %c0_i32 = arith.constant 0 : i32
    %c0_i32_0 = arith.constant 0 : i32
    %c0_i32_1 = arith.constant 0 : i32
    return %c0_i32, %c0_i32_0 : i32, i32
  }
  func.func @transform_4(%arg0: i32) -> (i32, i32) {
    %c0_i32 = arith.constant 0 : i32
    %c0_i32_0 = arith.constant 0 : i32
    %c0_i32_1 = arith.constant 0 : i32
    return %c0_i32, %c0_i32_0 : i32, i32
  }
  func.func @transform_5(%arg0: i32) -> (i32, i32) {
    %c0_i32 = arith.constant 0 : i32
    %c0_i32_0 = arith.constant 0 : i32
    %c0_i32_1 = arith.constant 0 : i32
    return %c0_i32, %c0_i32_0 : i32, i32
  }
  func.func @transform_6(%arg0: i32) -> (i32, i32) {
    %c0_i32 = arith.constant 0 : i32
    %c0_i32_0 = arith.constant 0 : i32
    %c0_i32_1 = arith.constant 0 : i32
    return %c0_i32, %c0_i32_0 : i32, i32
  }
  func.func @transform_7(%arg0: i32) -> (i32, i32) {
    %c0_i32 = arith.constant 0 : i32
    %c0_i32_0 = arith.constant 0 : i32
    return %arg0, %c0_i32 : i32, i32
  }
  func.func @transform_8(%arg0: i32) -> (i32, i32) {
    %c0_i32 = arith.constant 0 : i32
    %c0_i32_0 = arith.constant 0 : i32
    return %arg0, %c0_i32 : i32, i32
  }
}

</mosaic_0001>

<llo_original>
// kernel: tpu_custom_call.1
$region0: #{tpu_custom_call.1}
  #allocation0 [shape = 'u32[]', space=smem, size = 0x4, offset = 0x4, fixed_abs, tag = 'smem constant byte address 0x4 - core index']
  #allocation1 [shape = 'u32[144,128]{1,0:T(1,128)}', space=vmem, size = 0x12000, scoped, tag = 'internal scratch']
  %s0 = inlined_call_operand.vmem [shape: f32[16,32], index: 0, kind: input, shape index: {}]
  %s1 = inlined_call_operand.vmem [shape: f32[16,96], index: 1, kind: input, shape index: {}]
  %s2 = inlined_call_operand.vmem [shape: f32[32,64], index: 2, kind: input, shape index: {}]
  %s3 = inlined_call_operand.vmem [shape: f32[64,32], index: 3, kind: input, shape index: {}]
  %s4 = inlined_call_operand.vmem [shape: f32[1,32], index: 4, kind: input, shape index: {}]
  %s5 = inlined_call_operand.vmem [shape: f32[32,96], index: 5, kind: input, shape index: {}]
  %s6 = inlined_call_operand.vmem [shape: f32[1,96], index: 6, kind: input, shape index: {}]
  %s7 = inlined_call_operand.hbm [shape: f32[16,32], index: 7, kind: output, shape index: {0}]
  %s8 = inlined_call_operand.hbm [shape: f32[16,96], index: 8, kind: output, shape index: {1}]
  %9 = xla_tuple %s7, %s8
  %s10 = sld [smem:[#allocation0]]
  $region46: #{tpu_custom_call.1} parent=0
    _
  %s12 = ssub.s32 1, %s10
  %s13 = scalar_select 0, %s12, %s10
  $region1: #{tpu_custom_call.1} parent=0
    #allocation2 [shape = 'u8[8192]{0}', space=vmem, size = 0x2000, scoped, tag = 'output window, operand 0, single buffered']
    #allocation3 [shape = 's32[1]{0}', space=sflag, size = 0x4, scoped, tag = 'scoped memory for tpu_custom_call.1']
    #allocation4 [shape = 'u8[8192]{0}', space=vmem, size = 0x2000, scoped, tag = 'output window, operand 1, single buffered']
    #allocation5 [shape = 's32[1]{0}', space=sflag, size = 0x4, scoped, tag = 'scoped memory for tpu_custom_call.1']
    %14 = vsyncpa [#allocation3], 0
    %15 = vsyncpa [#allocation5], 0
    // Predicated region
    $region2: #{tpu_custom_call.1} parent=1 // pred_check
      _
    $region3: #{tpu_custom_call.1} parent=1 // pred_check_branch
      %17 = sbr.rel (0) target = $region5
    $region4: #{tpu_custom_call.1} parent=1 // pred_region
      _
    $region5: #{tpu_custom_call.1} parent=1 // pred_fallthru
      _
    // Predicated region
    $region6: #{tpu_custom_call.1} parent=1 // pred_check
      _
    $region7: #{tpu_custom_call.1} parent=1 // pred_check_branch
      %19 = sbr.rel (0) target = $region9
    $region8: #{tpu_custom_call.1} parent=1 // pred_region
      _
    $region9: #{tpu_custom_call.1} parent=1 // pred_fallthru
      _
    // Predicated region
    $region10: #{tpu_custom_call.1} parent=1 // pred_check
      _
    $region11: #{tpu_custom_call.1} parent=1 // pred_check_branch
      %21 = sbr.rel (0) target = $region13
    $region12: #{tpu_custom_call.1} parent=1 // pred_region
      _
    $region13: #{tpu_custom_call.1} parent=1 // pred_fallthru
      _
    // Predicated region
    $region14: #{tpu_custom_call.1} parent=1 // pred_check
      _
    $region15: #{tpu_custom_call.1} parent=1 // pred_check_branch
      %23 = sbr.rel (0) target = $region17
    $region16: #{tpu_custom_call.1} parent=1 // pred_region
      _
    $region17: #{tpu_custom_call.1} parent=1 // pred_fallthru
      _
    // Predicated region
    $region18: #{tpu_custom_call.1} parent=1 // pred_check
      _
    $region19: #{tpu_custom_call.1} parent=1 // pred_check_branch
      %25 = sbr.rel (0) target = $region21
    $region20: #{tpu_custom_call.1} parent=1 // pred_region
      _
    $region21: #{tpu_custom_call.1} parent=1 // pred_fallthru
      _
    // Predicated region
    $region22: #{tpu_custom_call.1} parent=1 // pred_check
      _
    $region23: #{tpu_custom_call.1} parent=1 // pred_check_branch
      %27 = sbr.rel (0) target = $region25
    $region24: #{tpu_custom_call.1} parent=1 // pred_region
      _
    $region25: #{tpu_custom_call.1} parent=1 // pred_fallthru
      _
    // Predicated region
    $region26: #{tpu_custom_call.1} parent=1 // pred_check
      _
    $region27: #{tpu_custom_call.1} parent=1 // pred_check_branch
      %29 = sbr.rel (0) target = $region29
    $region28: #{tpu_custom_call.1} parent=1 // pred_region
      _
    $region29: #{tpu_custom_call.1} parent=1 // pred_fallthru
      _
    %v30 = vld [vmem:[%s0] sm:$0xff]
    %v31 = vld [vmem:[%s0 + $0x8] sm:$0xff]
    %v32 = vld [vmem:[%s1] sm:$0xff]
    %v33 = vld [vmem:[%s1 + $0x8] sm:$0xff]
    %v34 = vld [vmem:[%s2] sm:$0xff]
    %v35 = vld [vmem:[%s2 + $0x8] sm:$0xff]
    %v36 = vld [vmem:[%s2 + $0x10] sm:$0xff]
    %v37 = vld [vmem:[%s2 + $0x18] sm:$0xff]
    %vm38 = vcmask 261120
    %v40 = vsel %vm38, %v32, 0
    %v43 = vsel %vm38, %v33, 0
    %45 = vmatprep.subr.mxu0 0.0
    %46 = vmatpush1.msra.mxu0 0.0
    %47 = vmatprep.subr.mxu0 0.0
    %48 = vmatpush1.msra.mxu0 0.0
    %49 = vmatprep.subr.mxu0 0.0
    %50 = vmatpush1.msra.mxu0 0.0
    %51 = vmatprep.subr.mxu0 0.0
    %52 = vmatpush1.msra.mxu0 0.0
    %53 = vmatprep.subr.mxu0 0.0
    %54 = vmatpush1.msra.mxu0 0.0
    %55 = vmatprep.subr.mxu0 0.0
    %56 = vmatpush1.msra.mxu0 0.0
    %57 = vmatprep.subr.mxu0 0.0
    %58 = vmatpush1.msra.mxu0 0.0
    %59 = vmatprep.subr.mxu0 0.0
    %60 = vmatpush1.msra.mxu0 0.0
    %61 = vmatprep.subr.mxu0 0.0
    %62 = vmatpush1.msra.mxu0 0.0
    %63 = vmatprep.subr.mxu0 0.0
    %64 = vmatpush1.msra.mxu0 0.0
    %65 = vmatprep.subr.mxu0 0.0
    %66 = vmatpush1.msra.mxu0 0.0
    %67 = vmatprep.subr.mxu0 0.0
    %68 = vmatpush1.msra.mxu0 0.0
    %69 = vmatprep.subr.mxu0 0.0
    %70 = vmatpush1.msra.mxu0 %v37
    %71 = vmatprep.subr.mxu0 0.0
    %72 = vmatpush1.msra.mxu0 %v36
    %73 = vmatprep.subr.mxu0 0.0
    %74 = vmatpush1.msra.mxu0 %v35
    %75 = vmatprep.subr.mxu0 0.0
    %76 = vmatpush1.msra.mxu0 %v34
    %77 = vmatprep.subr.mxu0 0.0
    %78 = vmatpush2.msra.mxu0 0.0
    %79 = vmatprep.subr.mxu0 0.0
    %80 = vmatpush2.msra.mxu0 0.0
    %81 = vmatprep.subr.mxu0 0.0
    %82 = vmatpush2.msra.mxu0 0.0
    %83 = vmatprep.subr.mxu0 0.0
    %84 = vmatpush2.msra.mxu0 0.0
    %85 = vmatprep.subr.mxu0 0.0
    %86 = vmatpush2.msra.mxu0 0.0
    %87 = vmatprep.subr.mxu0 0.0
    %88 = vmatpush2.msra.mxu0 0.0
    %89 = vmatprep.subr.mxu0 0.0
    %90 = vmatpush2.msra.mxu0 0.0
    %91 = vmatprep.subr.mxu0 0.0
    %92 = vmatpush2.msra.mxu0 0.0
    %93 = vmatprep.subr.mxu0 0.0
    %94 = vmatpush2.msra.mxu0 0.0
    %95 = vmatprep.subr.mxu0 0.0
    %96 = vmatpush2.msra.mxu0 0.0
    %97 = vmatprep.subr.mxu0 0.0
    %98 = vmatpush2.msra.mxu0 0.0
    %99 = vmatprep.subr.mxu0 0.0
    %100 = vmatpush2.msra.mxu0 0.0
    %101 = vmatprep.subr.mxu0 0.0
    %102 = vmatpush2.msra.mxu0 0.0
    %103 = vmatprep.subr.mxu0 0.0
    %104 = vmatpush2.msra.mxu0 0.0
    %105 = vmatprep.subr.mxu0 0.0
    %106 = vmatpush2.msra.mxu0 0.0
    %107 = vmatprep.subr.mxu0 0.0
    %108 = vmatpush2.msra.mxu0 0.0
    %109 = vmatprep.mubr.f32.mxu0 0.0
    %110 = vmatmul.mubr.f32.gmra.mxu0 %v40
    %v111 = vpop.f32.mrf.mxu0
    %v112 = vadd.f32 0.0, %v111
    %v113 = vpop.f32.mrf.mxu0
    %114 = vmatprep.mubr.f32.mxu0 0.0
    %115 = vmatmul.mubr.f32.gmra.mxu0 %v43
    %v116 = vpop.f32.mrf.mxu0
    %v117 = vadd.f32 0.0, %v116
    %v118 = vpop.f32.mrf.mxu0
    %119 = vdwg.mxu0
    %120 = vrot.lane.b32.xlu0 %v32, 96
    %v121 = vpop.permute.xlu0 %120
    %122 = vrot.lane.b32.xlu0 %v33, 96
    %v123 = vpop.permute.xlu0 %122
    %v124 = vsel %vm38, %v121, 0
    %v126 = vsel %vm38, %v123, 0
    %128 = vmatprep.subr.mxu0 0.0
    %129 = vmatpush1.msra.mxu0 0.0
    %130 = vmatprep.subr.mxu0 0.0
    %131 = vmatpush1.msra.mxu0 0.0
    %132 = vmatprep.subr.mxu0 0.0
    %133 = vmatpush1.msra.mxu0 0.0
    %134 = vmatprep.subr.mxu0 0.0
    %135 = vmatpush1.msra.mxu0 0.0
    %136 = vmatprep.subr.mxu0 0.0
    %137 = vmatpush1.msra.mxu0 0.0
    %138 = vmatprep.subr.mxu0 0.0
    %139 = vmatpush1.msra.mxu0 0.0
    %140 = vmatprep.subr.mxu0 0.0
    %141 = vmatpush1.msra.mxu0 0.0
    %142 = vmatprep.subr.mxu0 0.0
    %143 = vmatpush1.msra.mxu0 0.0
    %144 = vmatprep.subr.mxu0 0.0
    %145 = vmatpush1.msra.mxu0 0.0
    %146 = vmatprep.subr.mxu0 0.0
    %147 = vmatpush1.msra.mxu0 0.0
    %148 = vmatprep.subr.mxu0 0.0
    %149 = vmatpush1.msra.mxu0 0.0
    %150 = vmatprep.subr.mxu0 0.0
    %151 = vmatpush1.msra.mxu0 0.0
    %152 = vmatprep.subr.mxu0 0.0
    %153 = vmatpush1.msra.mxu0 %v37
    %154 = vmatprep.subr.mxu0 0.0
    %155 = vmatpush1.msra.mxu0 %v36
    %156 = vmatprep.subr.mxu0 0.0
    %157 = vmatpush1.msra.mxu0 %v35
    %158 = vmatprep.subr.mxu0 0.0
    %159 = vmatpush1.msra.mxu0 %v34
    %160 = vmatprep.subr.mxu0 0.0
    %161 = vmatpush2.msra.mxu0 0.0
    %162 = vmatprep.subr.mxu0 0.0
    %163 = vmatpush2.msra.mxu0 0.0
    %164 = vmatprep.subr.mxu0 0.0
    %165 = vmatpush2.msra.mxu0 0.0
    %166 = vmatprep.subr.mxu0 0.0
    %167 = vmatpush2.msra.mxu0 0.0
    %168 = vmatprep.subr.mxu0 0.0
    %169 = vmatpush2.msra.mxu0 0.0
    %170 = vmatprep.subr.mxu0 0.0
    %171 = vmatpush2.msra.mxu0 0.0
    %172 = vmatprep.subr.mxu0 0.0
    %173 = vmatpush2.msra.mxu0 0.0
    %174 = vmatprep.subr.mxu0 0.0
    %175 = vmatpush2.msra.mxu0 0.0
    %176 = vmatprep.subr.mxu0 0.0
    %177 = vmatpush2.msra.mxu0 0.0
    %178 = vmatprep.subr.mxu0 0.0
    %179 = vmatpush2.msra.mxu0 0.0
    %180 = vmatprep.subr.mxu0 0.0
    %181 = vmatpush2.msra.mxu0 0.0
    %182 = vmatprep.subr.mxu0 0.0
    %183 = vmatpush2.msra.mxu0 0.0
    %184 = vmatprep.subr.mxu0 0.0
    %185 = vmatpush2.msra.mxu0 0.0
    %186 = vmatprep.subr.mxu0 0.0
    %187 = vmatpush2.msra.mxu0 0.0
    %188 = vmatprep.subr.mxu0 0.0
    %189 = vmatpush2.msra.mxu0 0.0
    %190 = vmatprep.subr.mxu0 0.0
    %191 = vmatpush2.msra.mxu0 0.0
    %192 = vmatprep.mubr.f32.mxu0 0.0
    %193 = vmatmul.mubr.f32.gmra.mxu0 %v124
    %v194 = vpop.f32.mrf.mxu0
    %v195 = vadd.f32 0.0, %v194
    %v196 = vpop.f32.mrf.mxu0
    %197 = vmatprep.mubr.f32.mxu0 0.0
    %198 = vmatmul.mubr.f32.gmra.mxu0 %v126
    %v199 = vpop.f32.mrf.mxu0
    %v200 = vadd.f32 0.0, %v199
    %v201 = vpop.f32.mrf.mxu0
    %202 = vdwg.mxu0
    %203 = vrot.lane.b32.xlu0 %v32, 64
    %v204 = vpop.permute.xlu0 %203
    %205 = vrot.lane.b32.xlu0 %v33, 64
    %v206 = vpop.permute.xlu0 %205
    %v207 = vsel %vm38, %v204, 0
    %v209 = vsel %vm38, %v206, 0
    %211 = vmatprep.subr.mxu0 0.0
    %212 = vmatpush1.msra.mxu0 0.0
    %213 = vmatprep.subr.mxu0 0.0
    %214 = vmatpush1.msra.mxu0 0.0
    %215 = vmatprep.subr.mxu0 0.0
    %216 = vmatpush1.msra.mxu0 0.0
    %217 = vmatprep.subr.mxu0 0.0
    %218 = vmatpush1.msra.mxu0 0.0
    %219 = vmatprep.subr.mxu0 0.0
    %220 = vmatpush1.msra.mxu0 0.0
    %221 = vmatprep.subr.mxu0 0.0
    %222 = vmatpush1.msra.mxu0 0.0
    %223 = vmatprep.subr.mxu0 0.0
    %224 = vmatpush1.msra.mxu0 0.0
    %225 = vmatprep.subr.mxu0 0.0
    %226 = vmatpush1.msra.mxu0 0.0
    %227 = vmatprep.subr.mxu0 0.0
    %228 = vmatpush1.msra.mxu0 0.0
    %229 = vmatprep.subr.mxu0 0.0
    %230 = vmatpush1.msra.mxu0 0.0
    %231 = vmatprep.subr.mxu0 0.0
    %232 = vmatpush1.msra.mxu0 0.0
    %233 = vmatprep.subr.mxu0 0.0
    %234 = vmatpush1.msra.mxu0 0.0
    %235 = vmatprep.subr.mxu0 0.0
    %236 = vmatpush1.msra.mxu0 %v37
    %237 = vmatprep.subr.mxu0 0.0
    %238 = vmatpush1.msra.mxu0 %v36
    %239 = vmatprep.subr.mxu0 0.0
    %240 = vmatpush1.msra.mxu0 %v35
    %241 = vmatprep.subr.mxu0 0.0
    %242 = vmatpush1.msra.mxu0 %v34
    %243 = vmatprep.subr.mxu0 0.0
    %244 = vmatpush2.msra.mxu0 0.0
    %245 = vmatprep.subr.mxu0 0.0
    %246 = vmatpush2.msra.mxu0 0.0
    %247 = vmatprep.subr.mxu0 0.0
    %248 = vmatpush2.msra.mxu0 0.0
    %249 = vmatprep.subr.mxu0 0.0
    %250 = vmatpush2.msra.mxu0 0.0
    %251 = vmatprep.subr.mxu0 0.0
    %252 = vmatpush2.msra.mxu0 0.0
    %253 = vmatprep.subr.mxu0 0.0
    %254 = vmatpush2.msra.mxu0 0.0
    %255 = vmatprep.subr.mxu0 0.0
    %256 = vmatpush2.msra.mxu0 0.0
    %257 = vmatprep.subr.mxu0 0.0
    %258 = vmatpush2.msra.mxu0 0.0
    %259 = vmatprep.subr.mxu0 0.0
    %260 = vmatpush2.msra.mxu0 0.0
    %261 = vmatprep.subr.mxu0 0.0
    %262 = vmatpush2.msra.mxu0 0.0
    %263 = vmatprep.subr.mxu0 0.0
    %264 = vmatpush2.msra.mxu0 0.0
    %265 = vmatprep.subr.mxu0 0.0
    %266 = vmatpush2.msra.mxu0 0.0
    %267 = vmatprep.subr.mxu0 0.0
    %268 = vmatpush2.msra.mxu0 0.0
    %269 = vmatprep.subr.mxu0 0.0
    %270 = vmatpush2.msra.mxu0 0.0
    %271 = vmatprep.subr.mxu0 0.0
    %272 = vmatpush2.msra.mxu0 0.0
    %273 = vmatprep.subr.mxu0 0.0
    %274 = vmatpush2.msra.mxu0 0.0
    %275 = vmatprep.mubr.f32.mxu0 0.0
    %276 = vmatmul.mubr.f32.gmra.mxu0 %v207
    %v277 = vpop.f32.mrf.mxu0
    %v278 = vadd.f32 0.0, %v277
    %v279 = vpop.f32.mrf.mxu0
    %280 = vmatprep.mubr.f32.mxu0 0.0
    %281 = vmatmul.mubr.f32.gmra.mxu0 %v209
    %v282 = vpop.f32.mrf.mxu0
    %v283 = vadd.f32 0.0, %v282
    %v284 = vpop.f32.mrf.mxu0
    %285 = vdwg.mxu0
    %v286 = vmul.f32 %v112, %v112
    %v287 = vmul.f32 %v117, %v117
    %v288 = vmul.f32 %v195, %v195
    %v289 = vmul.f32 %v200, %v200
    %v290 = vadd.f32 %v286, %v288
    %v291 = vadd.f32 %v287, %v289
    %v292 = vmul.f32 %v278, %v278
    %v293 = vmul.f32 %v283, %v283
    %v294 = vadd.f32 %v290, %v292
    %v295 = vadd.f32 %v291, %v293
    %v296 = vadd.f32 %v294, 1e-08
    %v297 = vadd.f32 %v295, 1e-08
    %v298 = vrsqrt.pop %v296
    %v299 = vmul.f32 %v296, %v298
    %vm300 = vcmp.eq.f32.partialorder %v296, inf
    %v301 = vsel %vm300, %v296, %v299
    %vm302 = vcmp.eq.f32.partialorder %v296, 0.0
    %v303 = vand.u32 %v296, 2147483648
    %v304 = vsel %vm302, %v303, %v301
    %v305 = vrsqrt.pop %v297
    %v306 = vmul.f32 %v297, %v305
    %vm307 = vcmp.eq.f32.partialorder %v297, inf
    %v308 = vsel %vm307, %v297, %v306
    %vm309 = vcmp.eq.f32.partialorder %v297, 0.0
    %v310 = vand.u32 %v297, 2147483648
    %v311 = vsel %vm309, %v310, %v308
    %314 = vrot.lane.b32.xlu0 %v112, 96
    %v315 = vpop.permute.xlu0 %314
    %316 = vrot.lane.b32.xlu0 %v117, 96
    %v317 = vpop.permute.xlu0 %316
    %v320 = vmul.f32 %v112, %v315
    %v321 = vmul.f32 %v117, %v317
    %324 = vrot.lane.b32.xlu0 %v195, 96
    %v325 = vpop.permute.xlu0 %324
    %326 = vrot.lane.b32.xlu0 %v200, 96
    %v327 = vpop.permute.xlu0 %326
    %v330 = vmul.f32 %v195, %v325
    %v331 = vmul.f32 %v200, %v327
    %v332 = vadd.f32 %v320, %v330
    %v333 = vadd.f32 %v321, %v331
    %336 = vrot.lane.b32.xlu0 %v278, 96
    %v337 = vpop.permute.xlu0 %336
    %338 = vrot.lane.b32.xlu0 %v283, 96
    %v339 = vpop.permute.xlu0 %338
    %v342 = vmul.f32 %v278, %v337
    %v343 = vmul.f32 %v283, %v339
    %v344 = vadd.f32 %v332, %v342
    %v345 = vadd.f32 %v333, %v343
    %v346 = vld [vmem:[%s3] sm:$0xff]
    %v347 = vld [vmem:[%s3 + $0x8] sm:$0xff]
    %v348 = vld [vmem:[%s3 + $0x10] sm:$0xff]
    %v349 = vld [vmem:[%s3 + $0x18] sm:$0xff]
    %v350 = vld [vmem:[%s3 + $0x20] sm:$0xff]
    %v351 = vld [vmem:[%s3 + $0x28] sm:$0xff]
    %v352 = vld [vmem:[%s3 + $0x30] sm:$0xff]
    %v353 = vld [vmem:[%s3 + $0x38] sm:$0xff]
    %v355 = vsel %vm38, %v304, 0
    %v358 = vsel %vm38, %v311, 0
    %360 = vmatprep.subr.mxu0 0.0
    %361 = vmatpush1.msra.mxu0 0.0
    %362 = vmatprep.subr.mxu0 0.0
    %363 = vmatpush1.msra.mxu0 0.0
    %364 = vmatprep.subr.mxu0 0.0
    %365 = vmatpush1.msra.mxu0 0.0
    %366 = vmatprep.subr.mxu0 0.0
    %367 = vmatpush1.msra.mxu0 0.0
    %368 = vmatprep.subr.mxu0 0.0
    %369 = vmatpush1.msra.mxu0 0.0
    %370 = vmatprep.subr.mxu0 0.0
    %371 = vmatpush1.msra.mxu0 0.0
    %372 = vmatprep.subr.mxu0 0.0
    %373 = vmatpush1.msra.mxu0 0.0
    %374 = vmatprep.subr.mxu0 0.0
    %375 = vmatpush1.msra.mxu0 0.0
    %376 = vmatprep.subr.mxu0 0.0
    %377 = vmatpush1.msra.mxu0 0.0
    %378 = vmatprep.subr.mxu0 0.0
    %379 = vmatpush1.msra.mxu0 0.0
    %380 = vmatprep.subr.mxu0 0.0
    %381 = vmatpush1.msra.mxu0 0.0
    %382 = vmatprep.subr.mxu0 0.0
    %383 = vmatpush1.msra.mxu0 0.0
    %384 = vmatprep.subr.mxu0 0.0
    %385 = vmatpush1.msra.mxu0 %v353
    %386 = vmatprep.subr.mxu0 0.0
    %387 = vmatpush1.msra.mxu0 %v352
    %388 = vmatprep.subr.mxu0 0.0
    %389 = vmatpush1.msra.mxu0 %v351
    %390 = vmatprep.subr.mxu0 0.0
    %391 = vmatpush1.msra.mxu0 %v350
    %392 = vmatprep.subr.mxu0 0.0
    %393 = vmatpush2.msra.mxu0 0.0
    %394 = vmatprep.subr.mxu0 0.0
    %395 = vmatpush2.msra.mxu0 0.0
    %396 = vmatprep.subr.mxu0 0.0
    %397 = vmatpush2.msra.mxu0 0.0
    %398 = vmatprep.subr.mxu0 0.0
    %399 = vmatpush2.msra.mxu0 0.0
    %400 = vmatprep.subr.mxu0 0.0
    %401 = vmatpush2.msra.mxu0 0.0
    %402 = vmatprep.subr.mxu0 0.0
    %403 = vmatpush2.msra.mxu0 0.0
    %404 = vmatprep.subr.mxu0 0.0
    %405 = vmatpush2.msra.mxu0 0.0
    %406 = vmatprep.subr.mxu0 0.0
    %407 = vmatpush2.msra.mxu0 0.0
    %408 = vmatprep.subr.mxu0 0.0
    %409 = vmatpush2.msra.mxu0 0.0
    %410 = vmatprep.subr.mxu0 0.0
    %411 = vmatpush2.msra.mxu0 0.0
    %412 = vmatprep.subr.mxu0 0.0
    %413 = vmatpush2.msra.mxu0 0.0
    %414 = vmatprep.subr.mxu0 0.0
    %415 = vmatpush2.msra.mxu0 0.0
    %416 = vmatprep.subr.mxu0 0.0
    %417 = vmatpush2.msra.mxu0 0.0
    %418 = vmatprep.subr.mxu0 0.0
    %419 = vmatpush2.msra.mxu0 0.0
    %420 = vmatprep.subr.mxu0 0.0
    %421 = vmatpush2.msra.mxu0 0.0
    %422 = vmatprep.subr.mxu0 0.0
    %423 = vmatpush2.msra.mxu0 0.0
    %424 = vmatprep.mubr.f32.mxu0 0.0
    %425 = vmatmul.mubr.f32.gmra.mxu0 %v355
    %v426 = vpop.f32.mrf.mxu0
    %v427 = vadd.f32 0.0, %v426
    %v428 = vpop.f32.mrf.mxu0
    %429 = vmatprep.mubr.f32.mxu0 0.0
    %430 = vmatmul.mubr.f32.gmra.mxu0 %v358
    %v431 = vpop.f32.mrf.mxu0
    %v432 = vadd.f32 0.0, %v431
    %v433 = vpop.f32.mrf.mxu0
    %434 = vdwg.mxu0
    %v436 = vsel %vm38, %v30, 0
    %v439 = vsel %vm38, %v31, 0
    %441 = vmatprep.subr.mxu0 0.0
    %442 = vmatpush1.msra.mxu0 0.0
    %443 = vmatprep.subr.mxu0 0.0
    %444 = vmatpush1.msra.mxu0 0.0
    %445 = vmatprep.subr.mxu0 0.0
    %446 = vmatpush1.msra.mxu0 0.0
    %447 = vmatprep.subr.mxu0 0.0
    %448 = vmatpush1.msra.mxu0 0.0
    %449 = vmatprep.subr.mxu0 0.0
    %450 = vmatpush1.msra.mxu0 0.0
    %451 = vmatprep.subr.mxu0 0.0
    %452 = vmatpush1.msra.mxu0 0.0
    %453 = vmatprep.subr.mxu0 0.0
    %454 = vmatpush1.msra.mxu0 0.0
    %455 = vmatprep.subr.mxu0 0.0
    %456 = vmatpush1.msra.mxu0 0.0
    %457 = vmatprep.subr.mxu0 0.0
    %458 = vmatpush1.msra.mxu0 0.0
    %459 = vmatprep.subr.mxu0 0.0
    %460 = vmatpush1.msra.mxu0 0.0
    %461 = vmatprep.subr.mxu0 0.0
    %462 = vmatpush1.msra.mxu0 0.0
    %463 = vmatprep.subr.mxu0 0.0
    %464 = vmatpush1.msra.mxu0 0.0
    %465 = vmatprep.subr.mxu0 0.0
    %466 = vmatpush1.msra.mxu0 %v349
    %467 = vmatprep.subr.mxu0 0.0
    %468 = vmatpush1.msra.mxu0 %v348
    %469 = vmatprep.subr.mxu0 0.0
    %470 = vmatpush1.msra.mxu0 %v347
    %471 = vmatprep.subr.mxu0 0.0
    %472 = vmatpush1.msra.mxu0 %v346
    %473 = vmatprep.subr.mxu0 0.0
    %474 = vmatpush2.msra.mxu0 0.0
    %475 = vmatprep.subr.mxu0 0.0
    %476 = vmatpush2.msra.mxu0 0.0
    %477 = vmatprep.subr.mxu0 0.0
    %478 = vmatpush2.msra.mxu0 0.0
    %479 = vmatprep.subr.mxu0 0.0
    %480 = vmatpush2.msra.mxu0 0.0
    %481 = vmatprep.subr.mxu0 0.0
    %482 = vmatpush2.msra.mxu0 0.0
    %483 = vmatprep.subr.mxu0 0.0
    %484 = vmatpush2.msra.mxu0 0.0
    %485 = vmatprep.subr.mxu0 0.0
    %486 = vmatpush2.msra.mxu0 0.0
    %487 = vmatprep.subr.mxu0 0.0
    %488 = vmatpush2.msra.mxu0 0.0
    %489 = vmatprep.subr.mxu0 0.0
    %490 = vmatpush2.msra.mxu0 0.0
    %491 = vmatprep.subr.mxu0 0.0
    %492 = vmatpush2.msra.mxu0 0.0
    %493 = vmatprep.subr.mxu0 0.0
    %494 = vmatpush2.msra.mxu0 0.0
    %495 = vmatprep.subr.mxu0 0.0
    %496 = vmatpush2.msra.mxu0 0.0
    %497 = vmatprep.subr.mxu0 0.0
    %498 = vmatpush2.msra.mxu0 0.0
    %499 = vmatprep.subr.mxu0 0.0
    %500 = vmatpush2.msra.mxu0 0.0
    %501 = vmatprep.subr.mxu0 0.0
    %502 = vmatpush2.msra.mxu0 0.0
    %503 = vmatprep.subr.mxu0 0.0
    %504 = vmatpush2.msra.mxu0 0.0
    %505 = vmatprep.mubr.f32.mxu0 0.0
    %506 = vmatmul.mubr.f32.gmra.mxu0 %v436
    %v507 = vpop.f32.mrf.mxu0
    %v508 = vadd.f32 %v427, %v507
    %v509 = vpop.f32.mrf.mxu0
    %510 = vmatprep.mubr.f32.mxu0 0.0
    %511 = vmatmul.mubr.f32.gmra.mxu0 %v439
    %v512 = vpop.f32.mrf.mxu0
    %v513 = vadd.f32 %v432, %v512
    %v514 = vpop.f32.mrf.mxu0
    %515 = vdwg.mxu0
    %v516 = vld [vmem:[%s4] sm:$0x1]
    %v518 = vlaneseq
    %v519 = vshrl.u32 %v518, 7
    %v520 = vsub.s32 0, %v519
    %v521 = vrot.slane %v516, %v520
    %v523 = vadd.f32 %v508, %v521
    %v524 = vadd.f32 %v513, %v521
    %v525 = vxor.u32 %v523, 2147483648
    %v526 = vxor.u32 %v524, 2147483648
    %v527 = vmul.f32 %v525, 1.442695
    %v528 = vpow.pop %v527
    %v529 = vmul.f32 %v526, 1.442695
    %v530 = vpow.pop %v529
    %v531 = vadd.f32 %v528, 1.0
    %v532 = vadd.f32 %v530, 1.0
    %v533 = vrcp.pop %v531
    %v534 = vmul.f32 1.0, %v533
    %v535 = vrcp.pop %v532
    %v536 = vmul.f32 1.0, %v535
    %v537 = vmul.f32 %v523, %v534
    %v538 = vmul.f32 %v524, %v536
    %v539 = vld [vmem:[%s5] sm:$0xff]
    %v540 = vld [vmem:[%s5 + $0x8] sm:$0xff]
    %v541 = vld [vmem:[%s5 + $0x10] sm:$0xff]
    %v542 = vld [vmem:[%s5 + $0x18] sm:$0xff]
    %v543 = vld [vmem:[%s6] sm:$0x1]
    %v545 = vlaneseq
    %v546 = vshrl.u32 %v545, 7
    %v547 = vsub.s32 0, %v546
    %v548 = vrot.slane %v543, %v547
    %v551 = vsel %vm38, %v537, 0
    %v554 = vsel %vm38, %v538, 0
    %556 = vmatprep.subr.mxu0 0.0
    %557 = vmatpush1.msra.mxu0 0.0
    %558 = vmatprep.subr.mxu0 0.0
    %559 = vmatpush1.msra.mxu0 0.0
    %560 = vmatprep.subr.mxu0 0.0
    %561 = vmatpush1.msra.mxu0 0.0
    %562 = vmatprep.subr.mxu0 0.0
    %563 = vmatpush1.msra.mxu0 0.0
    %564 = vmatprep.subr.mxu0 0.0
    %565 = vmatpush1.msra.mxu0 0.0
    %566 = vmatprep.subr.mxu0 0.0
    %567 = vmatpush1.msra.mxu0 0.0
    %568 = vmatprep.subr.mxu0 0.0
    %569 = vmatpush1.msra.mxu0 0.0
    %570 = vmatprep.subr.mxu0 0.0
    %571 = vmatpush1.msra.mxu0 0.0
    %572 = vmatprep.subr.mxu0 0.0
    %573 = vmatpush1.msra.mxu0 0.0
    %574 = vmatprep.subr.mxu0 0.0
    %575 = vmatpush1.msra.mxu0 0.0
    %576 = vmatprep.subr.mxu0 0.0
    %577 = vmatpush1.msra.mxu0 0.0
    %578 = vmatprep.subr.mxu0 0.0
    %579 = vmatpush1.msra.mxu0 0.0
    %580 = vmatprep.subr.mxu0 0.0
    %581 = vmatpush1.msra.mxu0 %v542
    %582 = vmatprep.subr.mxu0 0.0
    %583 = vmatpush1.msra.mxu0 %v541
    %584 = vmatprep.subr.mxu0 0.0
    %585 = vmatpush1.msra.mxu0 %v540
    %586 = vmatprep.subr.mxu0 0.0
    %587 = vmatpush1.msra.mxu0 %v539
    %588 = vmatprep.subr.mxu0 0.0
    %589 = vmatpush2.msra.mxu0 0.0
    %590 = vmatprep.subr.mxu0 0.0
    %591 = vmatpush2.msra.mxu0 0.0
    %592 = vmatprep.subr.mxu0 0.0
    %593 = vmatpush2.msra.mxu0 0.0
    %594 = vmatprep.subr.mxu0 0.0
    %595 = vmatpush2.msra.mxu0 0.0
    %596 = vmatprep.subr.mxu0 0.0
    %597 = vmatpush2.msra.mxu0 0.0
    %598 = vmatprep.subr.mxu0 0.0
    %599 = vmatpush2.msra.mxu0 0.0
    %600 = vmatprep.subr.mxu0 0.0
    %601 = vmatpush2.msra.mxu0 0.0
    %602 = vmatprep.subr.mxu0 0.0
    %603 = vmatpush2.msra.mxu0 0.0
    %604 = vmatprep.subr.mxu0 0.0
    %605 = vmatpush2.msra.mxu0 0.0
    %606 = vmatprep.subr.mxu0 0.0
    %607 = vmatpush2.msra.mxu0 0.0
    %608 = vmatprep.subr.mxu0 0.0
    %609 = vmatpush2.msra.mxu0 0.0
    %610 = vmatprep.subr.mxu0 0.0
    %611 = vmatpush2.msra.mxu0 0.0
    %612 = vmatprep.subr.mxu0 0.0
    %613 = vmatpush2.msra.mxu0 0.0
    %614 = vmatprep.subr.mxu0 0.0
    %615 = vmatpush2.msra.mxu0 0.0
    %616 = vmatprep.subr.mxu0 0.0
    %617 = vmatpush2.msra.mxu0 0.0
    %618 = vmatprep.subr.mxu0 0.0
    %619 = vmatpush2.msra.mxu0 0.0
    %620 = vmatprep.mubr.f32.mxu0 0.0
    %621 = vmatmul.mubr.f32.gmra.mxu0 %v551
    %v622 = vpop.f32.mrf.mxu0
    %v623 = vadd.f32 %v548, %v622
    %v624 = vpop.f32.mrf.mxu0
    %625 = vmatprep.mubr.f32.mxu0 0.0
    %626 = vmatmul.mubr.f32.gmra.mxu0 %v554
    %v627 = vpop.f32.mrf.mxu0
    %v628 = vadd.f32 %v548, %v627
    %v629 = vpop.f32.mrf.mxu0
    %630 = vdwg.mxu0
    %v631 = vadd.f32 %v30, %v623
    %v632 = vadd.f32 %v31, %v628
    %635 = vrot.lane.b32.xlu0 %v344, 64
    %v636 = vpop.permute.xlu0 %635
    %637 = vrot.lane.b32.xlu0 %v345, 64
    %v638 = vpop.permute.xlu0 %637
    %v641 = vmul.f32 %v623, %v636
    %v642 = vmul.f32 %v628, %v638
    %645 = vrot.lane.b32.xlu0 %v641, 64
    %v646 = vpop.permute.xlu0 %645
    %647 = vrot.lane.b32.xlu0 %v642, 64
    %v648 = vpop.permute.xlu0 %647
    %v651 = vadd.f32 %v631, %v646
    %v652 = vadd.f32 %v632, %v648
    %653 = vst.msk [vmem:[#allocation2] sm:$0xff] %vm38, %v651
    %654 = vst.msk [vmem:[#allocation2 + $0x8] sm:$0xff] %vm38, %v652
    %v655 = vmul.f32 %v623, %v112
    %v656 = vmul.f32 %v628, %v117
    %v657 = vmul.f32 %v623, %v195
    %v658 = vmul.f32 %v628, %v200
    %v659 = vmul.f32 %v623, %v278
    %v660 = vmul.f32 %v628, %v283
    %663 = vrot.lane.b32.xlu0 %v655, 96
    %v664 = vpop.permute.xlu0 %663
    %665 = vrot.lane.b32.xlu0 %v656, 96
    %v666 = vpop.permute.xlu0 %665
    %671 = vrot.lane.b32.xlu0 %v659, 32
    %v672 = vpop.permute.xlu0 %671
    %673 = vrot.lane.b32.xlu0 %v660, 32
    %v674 = vpop.permute.xlu0 %673
    %v677 = vsel %vm38, %v664, %v657
    %v678 = vsel %vm38, %v666, %v658
    %vm679 = vcmask 523264
    %v680 = vsel %vm679, %v677, %v672
    %v681 = vsel %vm679, %v678, %v674
    %v682 = vadd.f32 %v32, %v680
    %v683 = vadd.f32 %v33, %v681
    %vm684 = vcmask 785408
    %685 = vst.msk [vmem:[#allocation4] sm:$0xff] %vm684, %v682
    %686 = vst.msk [vmem:[#allocation4 + $0x8] sm:$0xff] %vm684, %v683
    // Predicated region
    $region30: #{tpu_custom_call.1} parent=1 // pred_check
      _
    $region31: #{tpu_custom_call.1} parent=1 // pred_check_branch
      %688 = sbr.rel (0) target = $region33
    $region32: #{tpu_custom_call.1} parent=1 // pred_region
      %s690 = ssub.s32 256, 256
      %691 = vsyncadd [#allocation3], %s690
      %s692 = sshll.u32 [#allocation2], 4
      %s693 = int_to_ptr.vmem [resolvable:$true] %s692
      %698 = dma.vmem_to_hbm [thread:$0]  %s693, 256, %s7, [#allocation3], 128, 128, 8
    $region33: #{tpu_custom_call.1} parent=1 // pred_fallthru
      _
    // Predicated region
    $region34: #{tpu_custom_call.1} parent=1 // pred_check
      _
    $region35: #{tpu_custom_call.1} parent=1 // pred_check_branch
      %700 = sbr.rel (0) target = $region37
    $region36: #{tpu_custom_call.1} parent=1 // pred_region
      %s702 = ssub.s32 256, 256
      %703 = vsyncadd [#allocation5], %s702
      %s704 = sshll.u32 [#allocation4], 4
      %s705 = int_to_ptr.vmem [resolvable:$true] %s704
      %710 = dma.vmem_to_hbm [thread:$0]  %s705, 256, %s8, [#allocation5], 128, 128, 8
    $region37: #{tpu_custom_call.1} parent=1 // pred_fallthru
      _
    // Predicated region
    $region38: #{tpu_custom_call.1} parent=1 // pred_check
      _
    $region39: #{tpu_custom_call.1} parent=1 // pred_check_branch
      %712 = sbr.rel (0) target = $region41
    $region40: #{tpu_custom_call.1} parent=1 // pred_region
      %713 = dma.done [#allocation3], 256
    $region41: #{tpu_custom_call.1} parent=1 // pred_fallthru
      _
    // Predicated region
    $region42: #{tpu_custom_call.1} parent=1 // pred_check
      _
    $region43: #{tpu_custom_call.1} parent=1 // pred_check_branch
      %715 = sbr.rel (0) target = $region45
    $region44: #{tpu_custom_call.1} parent=1 // pred_region
      %716 = dma.done [#allocation5], 256
    $region45: #{tpu_custom_call.1} parent=1 // pred_fallthru
      _
    %717 = vsyncpa [#allocation3], 1
    %718 = vsyncpa [#allocation5], 1

</llo_original>
